<compile_context>
chip_gen: v7x
topology: tpu7x:2x2x1
jax: 0.10.0
libtpu: 0.0.40
codegen_flags: <defaults>
</compile_context>

<pallas_src>
import math

import jax
import jax.numpy as jnp
from jax.experimental import pallas as pl
from jax.experimental.pallas import tpu as pltpu


def concat_encoder_kernel(x_ref, e_ref, o_ref):
    # x_ref: (TM, E)         row block of the flattened [S*B, E] embedding
    # e_ref: (TM, dims_add)  row-tiled encoding slab (constant block index ->
    #                        fetched once, VMEM-resident for the whole grid)
    # o_ref: (TM, E + dims_add)
    #
    # Single fused, full-block, lane-dense store of [x | e].
    o_ref[...] = jnp.concatenate(
        [x_ref[...].astype(o_ref.dtype), e_ref[...].astype(o_ref.dtype)],
        axis=-1,
    )


def _vmem_profile():
    """Generation-aware VMEM budget / scoped limit / grid-step preference.

    v7x:    64 MiB VMEM per TensorCore, 2 cores/chip -> smaller blocks and
            >= 2 parallel grid steps so both cores get work.
    v5e/v6e: 128 MiB VMEM, single TensorCore -> one big block is best (the
            grid is a serial loop; extra steps just cost ~0.35 us each).
    Falls back to the conservative small-VMEM profile if the query fails.
    """
    vmem_cap = 64 << 20  # conservative default
    try:
        cap = getattr(pltpu.get_tpu_info(), "vmem_capacity_bytes", None)
        if cap:
            vmem_cap = int(cap)
    except Exception:
        pass
    limit = max(32 << 20, min(96 << 20, (vmem_cap * 3) // 4))  # scoped VMEM limit
    budget = max(16 << 20, limit // 2)                          # block-set budget
    min_grid_steps = 2 if vmem_cap <= (64 << 20) else 1
    return budget, limit, min_grid_steps


def _rows_per_block(S, B, padded_row_bytes, sublane, vmem_budget_bytes,
                    min_grid_steps):
    """Pick TM = B * ts (ts | S) so the *padded* double-buffered block set fits.

    padded_row_bytes already accounts for lane padding to 128 of each operand;
    rows are rounded to the dtype sublane multiple.  Candidates are restricted
    to Mosaic-legal blocks (TM % sublane == 0, or the full-extent block ts==S).
    """
    def rows(tm):
        return -(-tm // sublane) * sublane

    def block_bytes(ts):
        # x block + out block + e slab, each double-buffered by BlockSpec.
        return 2 * rows(B * ts) * padded_row_bytes

    valid = [ts for ts in range(1, S + 1)
             if S % ts == 0 and ((B * ts) % sublane == 0 or ts == S)]
    fitting = [ts for ts in valid if block_bytes(ts) <= vmem_budget_bytes]
    # TODO(synk): if even the smallest legal block exceeds the budget (huge
    # B*E), fall back to it and rely on vmem_limit_bytes headroom.
    cands = fitting or [min(valid)]

    def score(ts):
        steps = S // ts
        # Only require multiple steps when the chip actually has >1 TensorCore.
        multi_step = (steps >= min_grid_steps) or (S < min_grid_steps)
        return (multi_step, B * ts)

    return B * max(cands, key=score)


def concatenation_encoder(x, val, div_term, *, out_dtype=None,
                          vmem_budget_bytes=None):
    """x: [S, B, E], val: [B, 1], div_term: [dims_add // 2] -> [S, B, E+dims_add].

    out_dtype: optional narrower output dtype (e.g. jnp.bfloat16) when the
    consumer accepts it -- halves HBM write bytes of this HBM-bound kernel.
    """
    S, B, E = x.shape
    half = div_term.shape[-1]
    dims_add = 2 * half
    out_dim = E + dims_add
    out_dtype = x.dtype if out_dtype is None else jnp.dtype(out_dtype)

    budget, vmem_limit, min_grid_steps = _vmem_profile()
    if vmem_budget_bytes is not None:
        budget = vmem_budget_bytes

    x_bytes = jnp.dtype(x.dtype).itemsize
    o_bytes = jnp.dtype(out_dtype).itemsize
    sublane = max(8, 32 // min(x_bytes, o_bytes))  # 8 f32 / 16 bf16 / 32 int8

    def lane_pad(n):
        return -(-n // 128) * 128

    # Padded per-row VMEM footprint: x block + output block + e slab.
    padded_row_bytes = (lane_pad(E) * x_bytes
                        + (lane_pad(out_dim) + lane_pad(dims_add)) * o_bytes)

    TM = _rows_per_block(S, B, padded_row_bytes, sublane, budget, min_grid_steps)
    ts = TM // B
    total_rows = S * B
    grid = (total_rows // TM,)

    # Encoding computed once, in f32 (B * dims_add elements -- trivially cheap
    # XLA op), cast to the output dtype only at the end.  The double cos
    # (cos(cos(arg))) intentionally mirrors the PyTorch reference.
    arg = (val.reshape(B, 1).astype(jnp.float32)
           * div_term.reshape(1, half).astype(jnp.float32))
    e = jnp.concatenate([jnp.sin(arg), jnp.cos(jnp.cos(arg))], axis=-1)  # (B, dims_add)

    # Row-tiled slab for ONE block: after the [S,B,E] -> [S*B,E] flatten the
    # batch index cycles fastest and TM is a multiple of B, so the tile pattern
    # is identical for every block -> pass it once, keep it VMEM-resident.
    e_block = jnp.tile(e, (ts, 1)).astype(out_dtype)  # (TM, dims_add)

    x2d = x.reshape(total_rows, E)  # free: contiguous row-major view

    out2d = pl.pallas_call(
        concat_encoder_kernel,
        out_shape=jax.ShapeDtypeStruct((total_rows, out_dim), out_dtype),
        grid_spec=pltpu.PrefetchScalarGridSpec(
            num_scalar_prefetch=0,
            grid=grid,
            in_specs=[
                pl.BlockSpec((TM, E), lambda i: (i, 0)),         # row block of x
                pl.BlockSpec((TM, dims_add), lambda i: (0, 0)),  # constant block: fetched once
            ],
            out_specs=pl.BlockSpec((TM, out_dim), lambda i: (i, 0)),
        ),
        compiler_params=pltpu.CompilerParams(
            dimension_semantics=("parallel",),  # disjoint output blocks -> v7x megacore OK
            vmem_limit_bytes=vmem_limit,
        ),
    )(x2d, e_block)

    return out2d.reshape(S, B, out_dim)


def _reference(x, val, div_term):
    # Pure-JAX mirror of the PyTorch forward (dropout = identity at inference).
    e_sin = jnp.sin(val * div_term[None, :])
    e_cos = jnp.cos(jnp.cos(val * div_term[None, :]))
    e = jnp.concatenate([e_sin, e_cos], axis=-1)               # [B, dims_add]
    e = jnp.broadcast_to(e[None], (x.shape[0],) + e.shape)     # [S, B, dims_add]
    return jnp.concatenate([x, e], axis=-1)


if __name__ == "__main__":
    # Module hyperparameters (deterministic, in-script).
    dims_add = 10
    max_val = 200.0
    div_term = jnp.exp(
        jnp.arange(0, dims_add, 2, dtype=jnp.float32)
        * (-math.log(float(2 * max_val)) / dims_add)
    )  # shape [dims_add // 2] = [5]

    # Small example inputs consistent with the forward's [S, B, E] convention.
    S, B, E = 8, 2, 32
    key = jax.random.PRNGKey(0)
    kx, kv = jax.random.split(key)
    x = jax.random.normal(kx, (S, B, E), dtype=jnp.float32)
    val = jax.random.uniform(kv, (B, 1), dtype=jnp.float32, minval=0.0, maxval=max_val)

    out = concatenation_encoder(x, val, div_term)
    out = jax.block_until_ready(out)

    ref = _reference(x, val, div_term)
    assert out.shape == (S, B, E + dims_add), out.shape
    assert jnp.allclose(out, ref, atol=1e-5, rtol=1e-5), "mismatch vs reference"

    print("KERNEL_OK")
</pallas_src>

<mosaic_0001>
module attributes {stable_mosaic.version = 11 : i64} {
  func.func @concat_encoder_kernel(%arg0: i32, %arg1: memref<8x32xf32, #tpu.memory_space<vmem>>, %arg2: memref<8x10xf32, #tpu.memory_space<vmem>>, %arg3: memref<8x42xf32, #tpu.memory_space<vmem>>) attributes {dimension_semantics = [#tpu.dimension_semantics<parallel>], iteration_bounds = array<i64: 2>, scalar_prefetch = 0 : i64, scratch_operands = 0 : i64, tpu.core_type = #tpu.core_type<tc>, window_params = [{transform_indices = @transform_0, window_bounds = array<i64: 8, 32>}, {pipeline_mode = #tpu.pipeline_mode<synchronous>, transform_indices = @transform_1, window_bounds = array<i64: 8, 10>}, {transform_indices = @transform_2, window_bounds = array<i64: 8, 42>}]} {
    %c0 = arith.constant 0 : index
    %c0_0 = arith.constant 0 : index
    %0 = vector.load %arg1[%c0, %c0_0] : memref<8x32xf32, #tpu.memory_space<vmem>>, vector<8x32xf32>
    %c0_1 = arith.constant 0 : index
    %c0_2 = arith.constant 0 : index
    %1 = vector.load %arg2[%c0_1, %c0_2] : memref<8x10xf32, #tpu.memory_space<vmem>>, vector<8x10xf32>
    %2 = tpu.concatenate %0, %1 in 1 : vector<8x32xf32>, vector<8x10xf32> -> vector<8x42xf32>
    %c0_3 = arith.constant 0 : index
    %c0_4 = arith.constant 0 : index
    %3 = vector.load %arg3[%c0_3, %c0_4] : memref<8x42xf32, #tpu.memory_space<vmem>>, vector<8x42xf32>
    tpu.vector_store %arg3[%c0_3, %c0_4], %2 {strides = array<i32>} : memref<8x42xf32, #tpu.memory_space<vmem>>, vector<8x42xf32>,
    return
  }
  func.func @transform_0(%arg0: i32) -> (i32, i32) {
    %c0_i32 = arith.constant 0 : i32
    %c0_i32_0 = arith.constant 0 : i32
    return %arg0, %c0_i32 : i32, i32
  }
  func.func @transform_1(%arg0: i32) -> (i32, i32) {
    %c0_i32 = arith.constant 0 : i32
    %c0_i32_0 = arith.constant 0 : i32
    %c0_i32_1 = arith.constant 0 : i32
    return %c0_i32, %c0_i32_0 : i32, i32
  }
  func.func @transform_2(%arg0: i32) -> (i32, i32) {
    %c0_i32 = arith.constant 0 : i32
    %c0_i32_0 = arith.constant 0 : i32
    return %arg0, %c0_i32 : i32, i32
  }
}

</mosaic_0001>

<llo_original>
// kernel: tpu_custom_call.1
$region0: #{tpu_custom_call.1}
  #allocation0 [shape = 'u32[]', space=smem, size = 0x4, offset = 0x4, fixed_abs, tag = 'smem constant byte address 0x4 - core index']
  #allocation1 [shape = 'u32[144,128]{1,0:T(1,128)}', space=vmem, size = 0x12000, scoped, tag = 'internal scratch']
  %s0 = inlined_call_operand.hbm [shape: f32[16,32], index: 0, kind: input, shape index: {}]
  %s1 = inlined_call_operand.hbm [shape: f32[8,10], index: 1, kind: input, shape index: {}]
  %s2 = inlined_call_operand.hbm [shape: f32[16,42], index: 2, kind: output, shape index: {}]
  %s3 = sld [smem:[#allocation0]]
  $region49: #{tpu_custom_call.1} parent=0
    _
  %s5 = ssub.s32 1, %s3
  %s6 = scalar_select 0, %s5, %s3
  $region1: #{tpu_custom_call.1} parent=0
    #allocation2 [shape = 'u8[8192]{0}', space=vmem, size = 0x2000, scoped, tag = 'input window, operand 0']
    #allocation3 [shape = 's32[2]{0}', space=sflag, size = 0x8, scoped, tag = 'scoped memory for tpu_custom_call.1']
    #allocation4 [shape = 's32[2]{0}', space=sflag, size = 0x8, scoped, tag = 'scoped memory for tpu_custom_call.1']
    #allocation5 [shape = 'u8[4096]{0}', space=vmem, size = 0x1000, scoped, tag = 'input window, operand 1, single buffered']
    #allocation6 [shape = 's32[1]{0}', space=sflag, size = 0x4, scoped, tag = 'scoped memory for tpu_custom_call.1']
    #allocation7 [shape = 'u8[8192]{0}', space=vmem, size = 0x2000, scoped, tag = 'output window, operand 0']
    %7 = vsyncpa [#allocation3], 0
    %s8 = scalar_lea.sflag [#allocation3], 1
    %9 = vsyncpa %s8, 0
    %10 = vsyncpa [#allocation6], 0
    %11 = vsyncpa [#allocation4], 0
    %s12 = scalar_lea.sflag [#allocation4], 1
    %13 = vsyncpa %s12, 0
    loop: start=0, step=1, limit=4
    $region2: #{tpu_custom_call.1} parent=1 // loop_pre_header
      _
    $region3: #{tpu_custom_call.1} parent=1 // loop_header
      %s15 = sphi 0, %s19
      %p16 = scmp.ge.s32.totalorder %s15, 4
      %s25 = sphi 0, %s27
      %s28 = sphi 0, %s25
      %s29 = sphi 0, %s28
      %s45 = sphi 0, %s29
      %s49 = sphi 0, %s49
      %s51 = sphi 0, %s49
      %s52 = sphi 0, %s51
      %s66 = sphi 0, %s52
      %s72 = sphi 0, %s74
      %s75 = sphi 0, %s72
      %s76 = sphi 0, %s75
      %s92 = sphi 0, %s76
    $region4: #{tpu_custom_call.1} parent=1 // loop_header_branch
      %18 = sbr.rel (%p16) target = $region8
    $region5: #{tpu_custom_call.1} parent=1 // loop_body
      %s20 = ssub.s32 %s15, 1
      %s21 = ssub.s32 %s15, 2
      %s22 = sadd.s32 %s15, 1
      %s23 = ssub.s32 %s15, %s22
      %p24 = scmp.eq.s32.totalorder %s23, 0
      %s26 = sadd.s32 %s25, 1
      %s27 = scalar_select %p24, %s25, %s26
      %p30 = pneg %p24
      %p31 = scmp.eq.s32.totalorder %s15, 1
      %p32 = por %p30, %p31
      %p33 = scmp.ne.s32.totalorder %s25, %s28
      %p34 = scmp.eq.s32.totalorder %s15, 0
      %p35 = por %p33, %p34
      %p36 = scmp.ne.s32.totalorder %s25, %s28
      %p37 = scmp.eq.s32.totalorder %s20, 1
      %p38 = por %p36, %p37
      %p39 = scmp.ne.s32.totalorder %s28, %s29
      %p40 = scmp.eq.s32.totalorder %s20, 0
      %p41 = por %p39, %p40
      %p42 = scmp.ne.s32.totalorder %s28, %s29
      %p43 = scmp.eq.s32.totalorder %s21, 1
      %p44 = por %p42, %p43
      %p46 = scmp.ne.s32.totalorder %s29, %s45
      %p47 = scmp.eq.s32.totalorder %s21, 0
      %p48 = por %p46, %p47
      %s50 = sadd.s32 %s49, 1
      %p53 = scmp.eq.s32.totalorder %s15, 1
      %p54 = scmp.ne.s32.totalorder %s49, %s51
      %p55 = scmp.eq.s32.totalorder %s15, 0
      %p56 = por %p54, %p55
      %p57 = scmp.ne.s32.totalorder %s49, %s51
      %p58 = scmp.eq.s32.totalorder %s20, 1
      %p59 = por %p57, %p58
      %p60 = scmp.ne.s32.totalorder %s51, %s52
      %p61 = scmp.eq.s32.totalorder %s20, 0
      %p62 = por %p60, %p61
      %p63 = scmp.ne.s32.totalorder %s51, %s52
      %p64 = scmp.eq.s32.totalorder %s21, 1
      %p65 = por %p63, %p64
      %p67 = scmp.ne.s32.totalorder %s52, %s66
      %p68 = scmp.eq.s32.totalorder %s21, 0
      %p69 = por %p67, %p68
      %s70 = ssub.s32 %s15, %s22
      %p71 = scmp.eq.s32.totalorder %s70, 0
      %s73 = sadd.s32 %s72, 1
      %s74 = scalar_select %p71, %s72, %s73
      %p77 = pneg %p71
      %p78 = scmp.eq.s32.totalorder %s15, 1
      %p79 = por %p77, %p78
      %p80 = scmp.ne.s32.totalorder %s72, %s75
      %p81 = scmp.eq.s32.totalorder %s15, 0
      %p82 = por %p80, %p81
      %p83 = scmp.ne.s32.totalorder %s72, %s75
      %p84 = scmp.eq.s32.totalorder %s20, 1
      %p85 = por %p83, %p84
      %p86 = scmp.ne.s32.totalorder %s75, %s76
      %p87 = scmp.eq.s32.totalorder %s20, 0
      %p88 = por %p86, %p87
      %p89 = scmp.ne.s32.totalorder %s75, %s76
      %p90 = scmp.eq.s32.totalorder %s21, 1
      %p91 = por %p89, %p90
      %p93 = scmp.ne.s32.totalorder %s76, %s92
      %p94 = scmp.eq.s32.totalorder %s21, 0
      %p95 = por %p93, %p94
      %p96 = scmp.le.s32.totalorder 1, %s15
      %p97 = scmp.lt.s32.totalorder %s15, 3
      %p98 = pnand %p96, %p97
      %p99 = pneg %p98
      // Predicated region
      $region9: #{tpu_custom_call.1} parent=5 // pred_check
        _
      $region10: #{tpu_custom_call.1} parent=5 // pred_check_branch
        %101 = sbr.rel (%p98) target = $region12
      $region11: #{tpu_custom_call.1} parent=5 // pred_region
        %s102 = ssub.s32 %s15, 1
        // Predicated region
        $region13: #{tpu_custom_call.1} parent=11 // pred_check
          %p103 = pneg %p62
        $region14: #{tpu_custom_call.1} parent=11 // pred_check_branch
          %105 = sbr.rel (%p103) target = $region16
        $region15: #{tpu_custom_call.1} parent=11 // pred_region
          %s107 = ssub.s32 128, 128
          %108 = vsyncadd [#allocation6], %s107
          %s110 = sshll.u32 [#allocation5], 4
          %s111 = int_to_ptr.vmem [resolvable:$true] %s110
          %113 = dma.hbm_to_vmem [thread:$0]  %s1, 128, %s111, [#allocation6]
        $region16: #{tpu_custom_call.1} parent=11 // pred_fallthru
          _
      $region12: #{tpu_custom_call.1} parent=5 // pred_fallthru
        _
      %p114 = scmp.lt.s32.totalorder %s15, 2
      // Predicated region
      $region17: #{tpu_custom_call.1} parent=5 // pred_check
        %p115 = pneg %p114
      $region18: #{tpu_custom_call.1} parent=5 // pred_check_branch
        %117 = sbr.rel (%p115) target = $region20
      $region19: #{tpu_custom_call.1} parent=5 // pred_region
        // Predicated region
        $region21: #{tpu_custom_call.1} parent=19 // pred_check
          %p118 = pneg %p35
        $region22: #{tpu_custom_call.1} parent=19 // pred_check_branch
          %120 = sbr.rel (%p118) target = $region24
        $region23: #{tpu_custom_call.1} parent=19 // pred_region
          %s121 = sand.u32 %s25, 1
          %s122 = scalar_lea.sflag [#allocation3], %s121
          %s123 = sand.u32 %s25, 1
          %s124 = smul.addr %s123, 8
          %s125 = scalar_lea.vmem [#allocation2], %s124
          %s127 = ssub.s32 128, 128
          %128 = vsyncadd %s122, %s127
          %s129 = smul.addr %s15, 128
          %s130 = scalar_lea.hbm %s0, %s129
          %s132 = sshll.u32 %s125, 4
          %s133 = int_to_ptr.vmem [resolvable:$true] %s132
          %135 = dma.hbm_to_vmem [thread:$0]  %s130, 128, %s133, %s122
        $region24: #{tpu_custom_call.1} parent=19 // pred_fallthru
          _
      $region20: #{tpu_custom_call.1} parent=5 // pred_fallthru
        _
      %p136 = scmp.le.s32.totalorder 1, %s15
      %p137 = scmp.lt.s32.totalorder %s15, 3
      %p138 = pnand %p136, %p137
      %p139 = pneg %p138
      // Predicated region
      $region25: #{tpu_custom_call.1} parent=5 // pred_check
        _
      $region26: #{tpu_custom_call.1} parent=5 // pred_check_branch
        %141 = sbr.rel (%p138) target = $region28
      $region27: #{tpu_custom_call.1} parent=5 // pred_region
        %s142 = ssub.s32 %s15, 1
        %s143 = sand.u32 %s28, 1
        %s144 = scalar_lea.sflag [#allocation3], %s143
        %s145 = sand.u32 %s28, 1
        %s146 = smul.addr %s145, 8
        %s147 = scalar_lea.vmem [#allocation2], %s146
        // Predicated region
        $region29: #{tpu_custom_call.1} parent=27 // pred_check
          %p148 = pneg %p41
        $region30: #{tpu_custom_call.1} parent=27 // pred_check_branch
          %150 = sbr.rel (%p148) target = $region32
        $region31: #{tpu_custom_call.1} parent=27 // pred_region
          %151 = dma.done %s144, 128
        $region32: #{tpu_custom_call.1} parent=27 // pred_fallthru
          _
        // Predicated region
        $region33: #{tpu_custom_call.1} parent=27 // pred_check
          %p152 = pneg %p62
        $region34: #{tpu_custom_call.1} parent=27 // pred_check_branch
          %154 = sbr.rel (%p152) target = $region36
        $region35: #{tpu_custom_call.1} parent=27 // pred_region
          %155 = dma.done [#allocation6], 128
        $region36: #{tpu_custom_call.1} parent=27 // pred_fallthru
          _
        %s156 = sand.u32 %s28, 1
        %s157 = scalar_lea.sflag [#allocation3], %s156
        %s158 = sand.u32 %s28, 1
        %s159 = smul.addr %s158, 8
        %s160 = scalar_lea.vmem [#allocation2], %s159
        %p161 = pneg %p41
        %p162 = pneg %p38
        %p163 = pneg %p62
        %p164 = pneg %p59
        %p165 = pneg %p88
        %p166 = pneg %p85
        %s167 = sand.u32 %s75, 1
        %s168 = scalar_lea.sflag [#allocation4], %s167
        %s169 = sand.u32 %s75, 1
        %s170 = smul.addr %s169, 8
        %s171 = scalar_lea.vmem [#allocation7], %s170
        %v172 = vld [vmem:[%s147] sm:$0xff]
        %v173 = vld [vmem:[#allocation5] sm:$0xff]
        %175 = vrot.lane.b32.xlu0 %v173, 32
        %v176 = vpop.permute.xlu0 %175
        %vm178 = vcmask 261120
        %v179 = vsel %vm178, %v172, %v176
        %vm180 = vcmask 343040
        %181 = vst.msk [vmem:[%s171] sm:$0xff] %vm180, %v179
        %s182 = sand.u32 %s75, 1
        %s183 = scalar_lea.sflag [#allocation4], %s182
        %s184 = sand.u32 %s75, 1
        %s185 = smul.addr %s184, 8
        %s186 = scalar_lea.vmem [#allocation7], %s185
        // Predicated region
        $region37: #{tpu_custom_call.1} parent=27 // pred_check
          %p187 = pneg %p85
        $region38: #{tpu_custom_call.1} parent=27 // pred_check_branch
          %189 = sbr.rel (%p187) target = $region40
        $region39: #{tpu_custom_call.1} parent=27 // pred_region
          %s191 = ssub.s32 128, 128
          %192 = vsyncadd %s183, %s191
          %s193 = smul.addr %s20, 128
          %s194 = scalar_lea.hbm %s2, %s193
          %s196 = sshll.u32 %s186, 4
          %s197 = int_to_ptr.vmem [resolvable:$true] %s196
          %199 = dma.vmem_to_hbm [thread:$0]  %s197, 128, %s194, %s183
        $region40: #{tpu_custom_call.1} parent=27 // pred_fallthru
          _
      $region28: #{tpu_custom_call.1} parent=5 // pred_fallthru
        _
      %p200 = scmp.le.s32.totalorder 2, %s15
      // Predicated region
      $region41: #{tpu_custom_call.1} parent=5 // pred_check
        %p201 = pneg %p200
      $region42: #{tpu_custom_call.1} parent=5 // pred_check_branch
        %203 = sbr.rel (%p201) target = $region44
      $region43: #{tpu_custom_call.1} parent=5 // pred_region
        %s204 = ssub.s32 %s15, 2
        // Predicated region
        $region45: #{tpu_custom_call.1} parent=43 // pred_check
          %p205 = pneg %p91
        $region46: #{tpu_custom_call.1} parent=43 // pred_check_branch
          %207 = sbr.rel (%p205) target = $region48
        $region47: #{tpu_custom_call.1} parent=43 // pred_region
          %s208 = sand.u32 %s76, 1
          %s209 = scalar_lea.sflag [#allocation4], %s208
          %s210 = sand.u32 %s76, 1
          %s211 = smul.addr %s210, 8
          %s212 = scalar_lea.vmem [#allocation7], %s211
          %213 = dma.done %s209, 128
        $region48: #{tpu_custom_call.1} parent=43 // pred_fallthru
          _
      $region44: #{tpu_custom_call.1} parent=5 // pred_fallthru
        _
    $region6: #{tpu_custom_call.1} parent=1 // loop_footer
      %s19 = sadd.s32 1, %s15
    $region7: #{tpu_custom_call.1} parent=1 // loop_footer_branch
      %14 = sbr.rel target = $region3
    $region8: #{tpu_custom_call.1} parent=1 // loop_exit
      _
    %214 = vsyncpa [#allocation3], 1
    %s215 = scalar_lea.sflag [#allocation3], 1
    %216 = vsyncpa %s215, 1
    %217 = vsyncpa [#allocation6], 1
    %218 = vsyncpa [#allocation4], 1
    %s219 = scalar_lea.sflag [#allocation4], 1
    %220 = vsyncpa %s219, 1

</llo_original>
